<compile_context>
chip_gen: v7x
topology: tpu7x:2x2x1
jax: 0.10.0
libtpu: 0.0.40
codegen_flags: <defaults>
</compile_context>

<pallas_src>
import jax
import jax.numpy as jnp
from jax.experimental import pallas as pl
from jax.experimental.pallas import tpu as pltpu

EPS = 1e-5  # PyTorch BatchNorm1d default eps


def _bn_fold(h, gamma, beta):
    """Training-mode BatchNorm1d as a single scale/shift per element.

    var = E[h^2] - E[h]^2 (biased, as PyTorch uses for normalization in train mode).
    """
    mu = jnp.mean(h, axis=0, keepdims=True)
    ms = jnp.mean(h * h, axis=0, keepdims=True)
    var = ms - mu * mu
    scale = gamma * jax.lax.rsqrt(var + EPS)   # rsqrt -> EUP slot (free-ish)
    shift = beta - mu * scale
    return h * scale + shift


def mlp_model_kernel(x_ref, vecs_ref, w1_ref, w2_ref, w3_ref, o_ref):
    # Static sizes for slicing the packed parameter slab.
    n_in = x_ref.shape[1]
    n_hidden = w1_ref.shape[1]
    n_out = w3_ref.shape[1]

    # Packed (1,F) parameter vectors, static slices (no runtime cost).
    g0 = vecs_ref[0:1, :n_in]
    b0 = vecs_ref[1:2, :n_in]
    g1 = vecs_ref[2:3, :n_hidden]
    be1 = vecs_ref[3:4, :n_hidden]
    g2 = vecs_ref[4:5, :n_hidden]
    be2 = vecs_ref[5:6, :n_hidden]
    bb3 = vecs_ref[6:7, :n_out]

    x = x_ref[...].astype(jnp.float32)

    # self.inputs = MyBatchNorm(input_size)
    h = _bn_fold(x, g0, b0)

    # Linear(in, hidden) -> BN -> ReLU   (Linear bias cancelled by BN, omitted)
    h = jnp.dot(h, w1_ref[...], preferred_element_type=jnp.float32)
    h = jnp.maximum(_bn_fold(h, g1, be1), 0.0)

    # Linear(hidden, hidden) -> BN -> ReLU   (bias cancelled by BN, omitted)
    h = jnp.dot(h, w2_ref[...], preferred_element_type=jnp.float32)
    h = jnp.maximum(_bn_fold(h, g2, be2), 0.0)

    # Linear(hidden, out)
    o_ref[...] = jnp.dot(h, w3_ref[...], preferred_element_type=jnp.float32) + bb3


def _pack_vectors(params, input_size, hidden_size, output_size):
    """Pack the tiny (1,F) parameter vectors into one (8, P) f32 slab."""
    (g0, b0, _w1, _bb1, g1, be1, _w2, _bb2, g2, be2, _w3, bb3) = params
    P = max(input_size, hidden_size, output_size)

    def pad(v):
        return jnp.pad(v.astype(jnp.float32), ((0, 0), (0, P - v.shape[1])))

    rows = [pad(g0), pad(b0), pad(g1), pad(be1), pad(g2), pad(be2), pad(bb3),
            jnp.zeros((1, P), jnp.float32)]  # pad to 8 sublanes
    return jnp.concatenate(rows, axis=0)


def mlp_model_forward(x, params, state):
    """Pallas implementation of MLPModel.forward(x, state) -> (y, state).

    Note: the Linear biases feeding a training-mode BatchNorm (bb1, bb2) are
    mathematically dead and are not passed to the kernel.
    """
    (_g0, _b0, w1, _bb1, _g1, _be1, w2, _bb2, _g2, _be2, w3, _bb3) = params
    B, n_in = x.shape
    n_hidden = w1.shape[1]
    n_out = w3.shape[1]

    vecs = _pack_vectors(params, n_in, n_hidden, n_out)

    vspec = pl.BlockSpec(memory_space=pltpu.MemorySpace.VMEM)
    args = (x, vecs, w1, w2, w3)

    out = pl.pallas_call(
        mlp_model_kernel,
        out_shape=jax.ShapeDtypeStruct((B, n_out), jnp.float32),
        in_specs=[vspec] * len(args),
        out_specs=vspec,
        compiler_params=pltpu.CompilerParams(vmem_limit_bytes=64 << 20),
    )(*args)

    # TODO(synk): PyTorch BatchNorm1d in train() also updates running_mean/var;
    # MLPModel.state is (None,) and is returned unchanged here (forward output only).
    return out, state


def init_params(key, input_size, output_size, hidden_size):
    """Deterministic synthetic parameters (same shapes as the PyTorch module)."""
    ks = jax.random.split(key, 9)

    def linear(k, fan_in, fan_out):
        # PyTorch Linear weight is [out, in]; stored pre-transposed as [in, out].
        bound = 1.0 / jnp.sqrt(jnp.float32(fan_in))
        w = jax.random.uniform(k, (fan_in, fan_out), jnp.float32, -bound, bound)
        b = jax.random.uniform(jax.random.fold_in(k, 1), (1, fan_out), jnp.float32, -bound, bound)
        return w, b

    def bn(k, n):
        g = 1.0 + 0.1 * jax.random.normal(k, (1, n), jnp.float32)
        b = 0.1 * jax.random.normal(jax.random.fold_in(k, 1), (1, n), jnp.float32)
        return g, b

    g0, b0 = bn(ks[0], input_size)
    w1, bb1 = linear(ks[1], input_size, hidden_size)
    g1, be1 = bn(ks[2], hidden_size)
    w2, bb2 = linear(ks[3], hidden_size, hidden_size)
    g2, be2 = bn(ks[4], hidden_size)
    w3, bb3 = linear(ks[5], hidden_size, output_size)
    return (g0, b0, w1, bb1, g1, be1, w2, bb2, g2, be2, w3, bb3)


def reference_forward(x, params, state):
    """Pure-JAX reference with the ORIGINAL (unfused) BN and the Linear biases,
    to verify the fold / bias-cancellation optimizations are exact."""
    (g0, b0, w1, bb1, g1, be1, w2, bb2, g2, be2, w3, bb3) = params

    def batchnorm(h, gamma, beta):
        mu = jnp.mean(h, axis=0, keepdims=True)
        var = jnp.mean((h - mu) ** 2, axis=0, keepdims=True)
        return (h - mu) * jax.lax.rsqrt(var + EPS) * gamma + beta

    h = batchnorm(x, g0, b0)
    h = jnp.maximum(batchnorm(h @ w1 + bb1, g1, be1), 0.0)
    h = jnp.maximum(batchnorm(h @ w2 + bb2, g2, be2), 0.0)
    return h @ w3 + bb3, state


if __name__ == "__main__":
    # Small shapes consistent with lunar-lander style MLP usage.
    B, INPUT, OUTPUT, HIDDEN = 16, 8, 4, 32

    key = jax.random.PRNGKey(0)
    kx, kp = jax.random.split(key)
    x = jax.random.normal(kx, (B, INPUT), jnp.float32)
    params = init_params(kp, INPUT, OUTPUT, HIDDEN)
    state = (None,)  # MLPModel.zero_state(batch_size)

    y, out_state = mlp_model_forward(x, params, state)
    y = jax.block_until_ready(y)

    y_ref, _ = reference_forward(x, params, state)
    assert y.shape == (B, OUTPUT)
    assert jnp.allclose(y, y_ref, atol=1e-4, rtol=1e-4)
    assert out_state == state

    print("KERNEL_OK")
</pallas_src>

<mosaic_0001>
module attributes {stable_mosaic.version = 11 : i64} {
  func.func @mlp_model_kernel(%arg0: memref<16x8xf32, #tpu.memory_space<vmem>>, %arg1: memref<8x32xf32, #tpu.memory_space<vmem>>, %arg2: memref<8x32xf32, #tpu.memory_space<vmem>>, %arg3: memref<32x32xf32, #tpu.memory_space<vmem>>, %arg4: memref<32x4xf32, #tpu.memory_space<vmem>>, %arg5: memref<16x4xf32, #tpu.memory_space<vmem>>) attributes {dimension_semantics = [], scalar_prefetch = 0 : i64, scratch_operands = 0 : i64, tpu.core_type = #tpu.core_type<tc>} {
    %c0 = arith.constant 0 : index
    %c0_0 = arith.constant 0 : index
    %0 = vector.load %arg1[%c0, %c0_0] : memref<8x32xf32, #tpu.memory_space<vmem>>, vector<1x8xf32>
    %c1 = arith.constant 1 : index
    %c0_1 = arith.constant 0 : index
    %1 = vector.load %arg1[%c1, %c0_1] : memref<8x32xf32, #tpu.memory_space<vmem>>, vector<1x8xf32>
    %c2 = arith.constant 2 : index
    %c0_2 = arith.constant 0 : index
    %2 = vector.load %arg1[%c2, %c0_2] : memref<8x32xf32, #tpu.memory_space<vmem>>, vector<1x32xf32>
    %c3 = arith.constant 3 : index
    %c0_3 = arith.constant 0 : index
    %3 = vector.load %arg1[%c3, %c0_3] : memref<8x32xf32, #tpu.memory_space<vmem>>, vector<1x32xf32>
    %c4 = arith.constant 4 : index
    %c0_4 = arith.constant 0 : index
    %4 = vector.load %arg1[%c4, %c0_4] : memref<8x32xf32, #tpu.memory_space<vmem>>, vector<1x32xf32>
    %c5 = arith.constant 5 : index
    %c0_5 = arith.constant 0 : index
    %5 = vector.load %arg1[%c5, %c0_5] : memref<8x32xf32, #tpu.memory_space<vmem>>, vector<1x32xf32>
    %c6 = arith.constant 6 : index
    %c0_6 = arith.constant 0 : index
    %6 = vector.load %arg1[%c6, %c0_6] : memref<8x32xf32, #tpu.memory_space<vmem>>, vector<1x4xf32>
    %c0_7 = arith.constant 0 : index
    %c0_8 = arith.constant 0 : index
    %7 = vector.load %arg0[%c0_7, %c0_8] : memref<16x8xf32, #tpu.memory_space<vmem>>, vector<16x8xf32>
    %cst = arith.constant dense<0.000000e+00> : vector<8xf32>
    %8 = vector.multi_reduction <add>, %7, %cst [0] : vector<16x8xf32> to vector<8xf32>
    %9 = vector.shape_cast %8 : vector<8xf32> to vector<1x8xf32>
    %cst_9 = arith.constant 1.600000e+01 : f32
    %10 = vector.broadcast %cst_9 : f32 to vector<1x8xf32>
    %11 = arith.divf %9, %10 : vector<1x8xf32>
    %12 = arith.mulf %7, %7 : vector<16x8xf32>
    %cst_10 = arith.constant dense<0.000000e+00> : vector<8xf32>
    %13 = vector.multi_reduction <add>, %12, %cst_10 [0] : vector<16x8xf32> to vector<8xf32>
    %14 = vector.shape_cast %13 : vector<8xf32> to vector<1x8xf32>
    %cst_11 = arith.constant 1.600000e+01 : f32
    %15 = vector.broadcast %cst_11 : f32 to vector<1x8xf32>
    %16 = arith.divf %14, %15 : vector<1x8xf32>
    %17 = arith.mulf %11, %11 : vector<1x8xf32>
    %18 = arith.subf %16, %17 : vector<1x8xf32>
    %cst_12 = arith.constant 9.99999974E-6 : f32
    %19 = vector.broadcast %cst_12 : f32 to vector<1x8xf32>
    %20 = arith.addf %18, %19 : vector<1x8xf32>
    %21 = math.rsqrt %20 : vector<1x8xf32>
    %22 = arith.mulf %0, %21 : vector<1x8xf32>
    %23 = arith.mulf %11, %22 : vector<1x8xf32>
    %24 = arith.subf %1, %23 : vector<1x8xf32>
    %25 = vector.broadcast %22 : vector<1x8xf32> to vector<16x8xf32>
    %26 = arith.mulf %7, %25 : vector<16x8xf32>
    %27 = vector.broadcast %24 : vector<1x8xf32> to vector<16x8xf32>
    %28 = arith.addf %26, %27 : vector<16x8xf32>
    %c0_13 = arith.constant 0 : index
    %c0_14 = arith.constant 0 : index
    %29 = vector.load %arg2[%c0_13, %c0_14] : memref<8x32xf32, #tpu.memory_space<vmem>>, vector<8x32xf32>
    %cst_15 = arith.constant dense<0.000000e+00> : vector<16x32xf32>
    %30 = tpu.matmul %28, %29, %cst_15 {dimension_numbers = #tpu.dot_dimension_numbers<[1], [0], [0], [1], [0, 0, 1, 1], [], []>} : vector<16x8xf32>, vector<8x32xf32>, vector<16x32xf32> -> vector<16x32xf32>
    %cst_16 = arith.constant dense<0.000000e+00> : vector<32xf32>
    %31 = vector.multi_reduction <add>, %30, %cst_16 [0] : vector<16x32xf32> to vector<32xf32>
    %32 = vector.shape_cast %31 : vector<32xf32> to vector<1x32xf32>
    %cst_17 = arith.constant 1.600000e+01 : f32
    %33 = vector.broadcast %cst_17 : f32 to vector<1x32xf32>
    %34 = arith.divf %32, %33 : vector<1x32xf32>
    %35 = arith.mulf %30, %30 : vector<16x32xf32>
    %cst_18 = arith.constant dense<0.000000e+00> : vector<32xf32>
    %36 = vector.multi_reduction <add>, %35, %cst_18 [0] : vector<16x32xf32> to vector<32xf32>
    %37 = vector.shape_cast %36 : vector<32xf32> to vector<1x32xf32>
    %cst_19 = arith.constant 1.600000e+01 : f32
    %38 = vector.broadcast %cst_19 : f32 to vector<1x32xf32>
    %39 = arith.divf %37, %38 : vector<1x32xf32>
    %40 = arith.mulf %34, %34 : vector<1x32xf32>
    %41 = arith.subf %39, %40 : vector<1x32xf32>
    %cst_20 = arith.constant 9.99999974E-6 : f32
    %42 = vector.broadcast %cst_20 : f32 to vector<1x32xf32>
    %43 = arith.addf %41, %42 : vector<1x32xf32>
    %44 = math.rsqrt %43 : vector<1x32xf32>
    %45 = arith.mulf %2, %44 : vector<1x32xf32>
    %46 = arith.mulf %34, %45 : vector<1x32xf32>
    %47 = arith.subf %3, %46 : vector<1x32xf32>
    %48 = vector.broadcast %45 : vector<1x32xf32> to vector<16x32xf32>
    %49 = arith.mulf %30, %48 : vector<16x32xf32>
    %50 = vector.broadcast %47 : vector<1x32xf32> to vector<16x32xf32>
    %51 = arith.addf %49, %50 : vector<16x32xf32>
    %cst_21 = arith.constant 0.000000e+00 : f32
    %52 = vector.broadcast %cst_21 : f32 to vector<16x32xf32>
    %53 = arith.maximumf %51, %52 : vector<16x32xf32>
    %c0_22 = arith.constant 0 : index
    %c0_23 = arith.constant 0 : index
    %54 = vector.load %arg3[%c0_22, %c0_23] : memref<32x32xf32, #tpu.memory_space<vmem>>, vector<32x32xf32>
    %cst_24 = arith.constant dense<0.000000e+00> : vector<16x32xf32>
    %55 = tpu.matmul %53, %54, %cst_24 {dimension_numbers = #tpu.dot_dimension_numbers<[1], [0], [0], [1], [0, 0, 1, 1], [], []>} : vector<16x32xf32>, vector<32x32xf32>, vector<16x32xf32> -> vector<16x32xf32>
    %cst_25 = arith.constant dense<0.000000e+00> : vector<32xf32>
    %56 = vector.multi_reduction <add>, %55, %cst_25 [0] : vector<16x32xf32> to vector<32xf32>
    %57 = vector.shape_cast %56 : vector<32xf32> to vector<1x32xf32>
    %cst_26 = arith.constant 1.600000e+01 : f32
    %58 = vector.broadcast %cst_26 : f32 to vector<1x32xf32>
    %59 = arith.divf %57, %58 : vector<1x32xf32>
    %60 = arith.mulf %55, %55 : vector<16x32xf32>
    %cst_27 = arith.constant dense<0.000000e+00> : vector<32xf32>
    %61 = vector.multi_reduction <add>, %60, %cst_27 [0] : vector<16x32xf32> to vector<32xf32>
    %62 = vector.shape_cast %61 : vector<32xf32> to vector<1x32xf32>
    %cst_28 = arith.constant 1.600000e+01 : f32
    %63 = vector.broadcast %cst_28 : f32 to vector<1x32xf32>
    %64 = arith.divf %62, %63 : vector<1x32xf32>
    %65 = arith.mulf %59, %59 : vector<1x32xf32>
    %66 = arith.subf %64, %65 : vector<1x32xf32>
    %cst_29 = arith.constant 9.99999974E-6 : f32
    %67 = vector.broadcast %cst_29 : f32 to vector<1x32xf32>
    %68 = arith.addf %66, %67 : vector<1x32xf32>
    %69 = math.rsqrt %68 : vector<1x32xf32>
    %70 = arith.mulf %4, %69 : vector<1x32xf32>
    %71 = arith.mulf %59, %70 : vector<1x32xf32>
    %72 = arith.subf %5, %71 : vector<1x32xf32>
    %73 = vector.broadcast %70 : vector<1x32xf32> to vector<16x32xf32>
    %74 = arith.mulf %55, %73 : vector<16x32xf32>
    %75 = vector.broadcast %72 : vector<1x32xf32> to vector<16x32xf32>
    %76 = arith.addf %74, %75 : vector<16x32xf32>
    %cst_30 = arith.constant 0.000000e+00 : f32
    %77 = vector.broadcast %cst_30 : f32 to vector<16x32xf32>
    %78 = arith.maximumf %76, %77 : vector<16x32xf32>
    %c0_31 = arith.constant 0 : index
    %c0_32 = arith.constant 0 : index
    %79 = vector.load %arg4[%c0_31, %c0_32] : memref<32x4xf32, #tpu.memory_space<vmem>>, vector<32x4xf32>
    %cst_33 = arith.constant dense<0.000000e+00> : vector<16x4xf32>
    %80 = tpu.matmul %78, %79, %cst_33 {dimension_numbers = #tpu.dot_dimension_numbers<[1], [0], [0], [1], [0, 0, 1, 1], [], []>} : vector<16x32xf32>, vector<32x4xf32>, vector<16x4xf32> -> vector<16x4xf32>
    %81 = vector.broadcast %6 : vector<1x4xf32> to vector<16x4xf32>
    %82 = arith.addf %80, %81 : vector<16x4xf32>
    %c0_34 = arith.constant 0 : index
    %c0_35 = arith.constant 0 : index
    %83 = vector.load %arg5[%c0_34, %c0_35] : memref<16x4xf32, #tpu.memory_space<vmem>>, vector<16x4xf32>
    tpu.vector_store %arg5[%c0_34, %c0_35], %82 {strides = array<i32>} : memref<16x4xf32, #tpu.memory_space<vmem>>, vector<16x4xf32>,
    return
  }
}

</mosaic_0001>

<llo_original>
// kernel: tpu_custom_call.1
$region0: #{tpu_custom_call.1}
  #allocation0 [shape = 'u32[]', space=smem, size = 0x4, offset = 0x4, fixed_abs, tag = 'smem constant byte address 0x4 - core index']
  #allocation1 [shape = 'u32[144,128]{1,0:T(1,128)}', space=vmem, size = 0x12000, scoped, tag = 'internal scratch']
  %s0 = inlined_call_operand.hbm [shape: f32[16,8], index: 0, kind: input, shape index: {}]
  %s1 = inlined_call_operand.hbm [shape: f32[8,32], index: 1, kind: input, shape index: {}]
  %s2 = inlined_call_operand.hbm [shape: f32[8,32], index: 2, kind: input, shape index: {}]
  %s3 = inlined_call_operand.hbm [shape: f32[32,32], index: 3, kind: input, shape index: {}]
  %s4 = inlined_call_operand.hbm [shape: f32[32,4], index: 4, kind: input, shape index: {}]
  %s5 = inlined_call_operand.hbm [shape: f32[16,4], index: 5, kind: output, shape index: {}]
  %s6 = sld [smem:[#allocation0]]
  $region50: #{tpu_custom_call.1} parent=0
    _
  %s8 = ssub.s32 1, %s6
  %s9 = scalar_select 0, %s8, %s6
  $region1: #{tpu_custom_call.1} parent=0
    #allocation2 [shape = 'u8[8192]{0}', space=vmem, size = 0x2000, scoped, tag = 'input window, operand 0, single buffered']
    #allocation3 [shape = 's32[1]{0}', space=sflag, size = 0x4, scoped, tag = 'scoped memory for tpu_custom_call.1']
    #allocation4 [shape = 's32[1]{0}', space=sflag, size = 0x4, scoped, tag = 'scoped memory for tpu_custom_call.1']
    #allocation5 [shape = 'u8[4096]{0}', space=vmem, size = 0x1000, scoped, tag = 'input window, operand 1, single buffered']
    #allocation6 [shape = 's32[1]{0}', space=sflag, size = 0x4, scoped, tag = 'scoped memory for tpu_custom_call.1']
    #allocation7 [shape = 'u8[4096]{0}', space=vmem, size = 0x1000, scoped, tag = 'input window, operand 2, single buffered']
    #allocation8 [shape = 'u8[16384]{0}', space=vmem, size = 0x4000, scoped, tag = 'input window, operand 3, single buffered']
    #allocation9 [shape = 's32[1]{0}', space=sflag, size = 0x4, scoped, tag = 'scoped memory for tpu_custom_call.1']
    #allocation10 [shape = 'u8[16384]{0}', space=vmem, size = 0x4000, scoped, tag = 'input window, operand 4, single buffered']
    #allocation11 [shape = 'u8[8192]{0}', space=vmem, size = 0x2000, scoped, tag = 'output window, operand 0, single buffered']
    %10 = vsyncpa [#allocation3], 0
    %11 = vsyncpa [#allocation6], 0
    %12 = vsyncpa [#allocation9], 0
    %13 = vsyncpa [#allocation4], 0
    // Predicated region
    $region2: #{tpu_custom_call.1} parent=1 // pred_check
      _
    $region3: #{tpu_custom_call.1} parent=1 // pred_check_branch
      %15 = sbr.rel (0) target = $region5
    $region4: #{tpu_custom_call.1} parent=1 // pred_region
      %s17 = ssub.s32 256, 256
      %18 = vsyncadd [#allocation3], %s17
      %s19 = sshll.u32 [#allocation2], 4
      %s20 = int_to_ptr.vmem [resolvable:$true] %s19
      %25 = dma.hbm_to_vmem [thread:$0]  %s0, 256, %s20, [#allocation3], 128, 128, 8
    $region5: #{tpu_custom_call.1} parent=1 // pred_fallthru
      _
    // Predicated region
    $region6: #{tpu_custom_call.1} parent=1 // pred_check
      _
    $region7: #{tpu_custom_call.1} parent=1 // pred_check_branch
      %27 = sbr.rel (0) target = $region9
    $region8: #{tpu_custom_call.1} parent=1 // pred_region
      %s29 = ssub.s32 128, 128
      %30 = vsyncadd [#allocation6], %s29
      %s32 = sshll.u32 [#allocation5], 4
      %s33 = int_to_ptr.vmem [resolvable:$true] %s32
      %35 = dma.hbm_to_vmem [thread:$0]  %s1, 128, %s33, [#allocation6]
    $region9: #{tpu_custom_call.1} parent=1 // pred_fallthru
      _
    // Predicated region
    $region10: #{tpu_custom_call.1} parent=1 // pred_check
      _
    $region11: #{tpu_custom_call.1} parent=1 // pred_check_branch
      %37 = sbr.rel (0) target = $region13
    $region12: #{tpu_custom_call.1} parent=1 // pred_region
      %s39 = ssub.s32 128, 128
      %40 = vsyncadd [#allocation6], %s39
      %s42 = sshll.u32 [#allocation7], 4
      %s43 = int_to_ptr.vmem [resolvable:$true] %s42
      %45 = dma.hbm_to_vmem [thread:$0]  %s2, 128, %s43, [#allocation6]
    $region13: #{tpu_custom_call.1} parent=1 // pred_fallthru
      _
    // Predicated region
    $region14: #{tpu_custom_call.1} parent=1 // pred_check
      _
    $region15: #{tpu_custom_call.1} parent=1 // pred_check_branch
      %47 = sbr.rel (0) target = $region17
    $region16: #{tpu_custom_call.1} parent=1 // pred_region
      %s49 = ssub.s32 512, 512
      %50 = vsyncadd [#allocation9], %s49
      %s51 = sshll.u32 [#allocation8], 4
      %s52 = int_to_ptr.vmem [resolvable:$true] %s51
      %57 = dma.hbm_to_vmem [thread:$0]  %s3, 512, %s52, [#allocation9], 128, 128, 8
    $region17: #{tpu_custom_call.1} parent=1 // pred_fallthru
      _
    // Predicated region
    $region18: #{tpu_custom_call.1} parent=1 // pred_check
      _
    $region19: #{tpu_custom_call.1} parent=1 // pred_check_branch
      %59 = sbr.rel (0) target = $region21
    $region20: #{tpu_custom_call.1} parent=1 // pred_region
      %s61 = ssub.s32 512, 512
      %62 = vsyncadd [#allocation9], %s61
      %s63 = sshll.u32 [#allocation10], 4
      %s64 = int_to_ptr.vmem [resolvable:$true] %s63
      %69 = dma.hbm_to_vmem [thread:$0]  %s4, 512, %s64, [#allocation9], 128, 128, 8
    $region21: #{tpu_custom_call.1} parent=1 // pred_fallthru
      _
    // Predicated region
    $region22: #{tpu_custom_call.1} parent=1 // pred_check
      _
    $region23: #{tpu_custom_call.1} parent=1 // pred_check_branch
      %71 = sbr.rel (0) target = $region25
    $region24: #{tpu_custom_call.1} parent=1 // pred_region
      %72 = dma.done [#allocation3], 256
    $region25: #{tpu_custom_call.1} parent=1 // pred_fallthru
      _
    // Predicated region
    $region26: #{tpu_custom_call.1} parent=1 // pred_check
      _
    $region27: #{tpu_custom_call.1} parent=1 // pred_check_branch
      %74 = sbr.rel (0) target = $region29
    $region28: #{tpu_custom_call.1} parent=1 // pred_region
      %75 = dma.done [#allocation6], 128
    $region29: #{tpu_custom_call.1} parent=1 // pred_fallthru
      _
    // Predicated region
    $region30: #{tpu_custom_call.1} parent=1 // pred_check
      _
    $region31: #{tpu_custom_call.1} parent=1 // pred_check_branch
      %77 = sbr.rel (0) target = $region33
    $region32: #{tpu_custom_call.1} parent=1 // pred_region
      %78 = dma.done [#allocation6], 128
    $region33: #{tpu_custom_call.1} parent=1 // pred_fallthru
      _
    // Predicated region
    $region34: #{tpu_custom_call.1} parent=1 // pred_check
      _
    $region35: #{tpu_custom_call.1} parent=1 // pred_check_branch
      %80 = sbr.rel (0) target = $region37
    $region36: #{tpu_custom_call.1} parent=1 // pred_region
      %81 = dma.done [#allocation9], 512
    $region37: #{tpu_custom_call.1} parent=1 // pred_fallthru
      _
    // Predicated region
    $region38: #{tpu_custom_call.1} parent=1 // pred_check
      _
    $region39: #{tpu_custom_call.1} parent=1 // pred_check_branch
      %83 = sbr.rel (0) target = $region41
    $region40: #{tpu_custom_call.1} parent=1 // pred_region
      %84 = dma.done [#allocation9], 512
    $region41: #{tpu_custom_call.1} parent=1 // pred_fallthru
      _
    %v85 = vld [vmem:[#allocation5] sm:$0x1]
    %v86 = vld [vmem:[#allocation5 + $0x1] sm:$0x1]
    %v87 = vld [vmem:[#allocation5 + $0x2] sm:$0x1]
    %v88 = vld [vmem:[#allocation5 + $0x3] sm:$0x1]
    %v89 = vld [vmem:[#allocation5 + $0x4] sm:$0x1]
    %v90 = vld [vmem:[#allocation5 + $0x5] sm:$0x1]
    %v91 = vld [vmem:[#allocation5 + $0x6] sm:$0x1]
    %v92 = vld [vmem:[#allocation2] sm:$0xff]
    %v93 = vld [vmem:[#allocation2 + $0x8] sm:$0xff]
    %vm94 = vcmask 64512
    %v95 = vsel %vm94, %v92, 0.0
    %v96 = vsel %vm94, %v93, 0.0
    %v97 = vadd.f32 %v95, %v96
    %v98 = vrot.slane %v97, 4
    %v99 = vadd.f32 %v97, %v98
    %v100 = vrot.slane %v99, 2
    %v101 = vadd.f32 %v99, %v100
    %v102 = vrot.slane %v101, 1
    %v103 = vadd.f32 %v101, %v102
    %v104 = vrcp.pop 16.0
    %v105 = vmul.f32 %v103, %v104
    %v106 = vmul.f32 %v92, %v92
    %v107 = vmul.f32 %v93, %v93
    %v108 = vsel %vm94, %v106, 0.0
    %v109 = vsel %vm94, %v107, 0.0
    %v110 = vadd.f32 %v108, %v109
    %v111 = vrot.slane %v110, 4
    %v112 = vadd.f32 %v110, %v111
    %v113 = vrot.slane %v112, 2
    %v114 = vadd.f32 %v112, %v113
    %v115 = vrot.slane %v114, 1
    %v116 = vadd.f32 %v114, %v115
    %v117 = vmul.f32 %v116, %v104
    %v118 = vmul.f32 %v105, %v105
    %v119 = vsub.f32 %v117, %v118
    %v120 = vadd.f32 %v119, 1e-05
    %v121 = vrsqrt.pop %v120
    %v122 = vmul.f32 %v85, %v121
    %v123 = vmul.f32 %v105, %v122
    %v124 = vsub.f32 %v86, %v123
    %v125 = vlaneseq
    %v126 = vshrl.u32 %v125, 7
    %v127 = vsub.s32 0, %v126
    %v128 = vrot.slane %v122, %v127
    %v129 = vmul.f32 %v92, %v128
    %v130 = vmul.f32 %v93, %v128
    %v131 = vlaneseq
    %v132 = vshrl.u32 %v131, 7
    %v133 = vsub.s32 0, %v132
    %v134 = vrot.slane %v124, %v133
    %v135 = vadd.f32 %v129, %v134
    %v136 = vadd.f32 %v130, %v134
    %v137 = vld [vmem:[#allocation7] sm:$0xff]
    %v139 = vsel %vm94, %v135, 0
    %v142 = vsel %vm94, %v136, 0
    %144 = vmatprep.subr.mxu0 0.0
    %145 = vmatpush1.msra.mxu0 %v137
    %146 = vmatprep.subr.mxu0 0.0
    %147 = vmatpush1.msra.mxu0 0.0
    %148 = vmatprep.subr.mxu0 0.0
    %149 = vmatpush1.msra.mxu0 0.0
    %150 = vmatprep.subr.mxu0 0.0
    %151 = vmatpush1.msra.mxu0 0.0
    %152 = vmatprep.subr.mxu0 0.0
    %153 = vmatpush1.msra.mxu0 0.0
    %154 = vmatprep.subr.mxu0 0.0
    %155 = vmatpush1.msra.mxu0 0.0
    %156 = vmatprep.subr.mxu0 0.0
    %157 = vmatpush1.msra.mxu0 0.0
    %158 = vmatprep.subr.mxu0 0.0
    %159 = vmatpush1.msra.mxu0 0.0
    %160 = vmatprep.subr.mxu0 0.0
    %161 = vmatpush1.msra.mxu0 0.0
    %162 = vmatprep.subr.mxu0 0.0
    %163 = vmatpush1.msra.mxu0 0.0
    %164 = vmatprep.subr.mxu0 0.0
    %165 = vmatpush1.msra.mxu0 0.0
    %166 = vmatprep.subr.mxu0 0.0
    %167 = vmatpush1.msra.mxu0 0.0
    %168 = vmatprep.subr.mxu0 0.0
    %169 = vmatpush1.msra.mxu0 0.0
    %170 = vmatprep.subr.mxu0 0.0
    %171 = vmatpush1.msra.mxu0 0.0
    %172 = vmatprep.subr.mxu0 0.0
    %173 = vmatpush1.msra.mxu0 0.0
    %174 = vmatprep.subr.mxu0 0.0
    %175 = vmatpush1.msra.mxu0 0.0
    %176 = vmatprep.subr.mxu0 0.0
    %177 = vmatpush1.msra.mxu0 0.0
    %178 = vmatprep.subr.mxu0 0.0
    %179 = vmatpush1.msra.mxu0 0.0
    %180 = vmatprep.subr.mxu0 0.0
    %181 = vmatpush1.msra.mxu0 0.0
    %182 = vmatprep.subr.mxu0 0.0
    %183 = vmatpush1.msra.mxu0 0.0
    %184 = vmatprep.subr.mxu0 0.0
    %185 = vmatpush1.msra.mxu0 0.0
    %186 = vmatprep.subr.mxu0 0.0
    %187 = vmatpush1.msra.mxu0 0.0
    %188 = vmatprep.subr.mxu0 0.0
    %189 = vmatpush1.msra.mxu0 0.0
    %190 = vmatprep.subr.mxu0 0.0
    %191 = vmatpush1.msra.mxu0 0.0
    %192 = vmatprep.subr.mxu0 0.0
    %193 = vmatpush1.msra.mxu0 0.0
    %194 = vmatprep.subr.mxu0 0.0
    %195 = vmatpush1.msra.mxu0 0.0
    %196 = vmatprep.subr.mxu0 0.0
    %197 = vmatpush1.msra.mxu0 0.0
    %198 = vmatprep.subr.mxu0 0.0
    %199 = vmatpush1.msra.mxu0 0.0
    %200 = vmatprep.subr.mxu0 0.0
    %201 = vmatpush1.msra.mxu0 0.0
    %202 = vmatprep.subr.mxu0 0.0
    %203 = vmatpush1.msra.mxu0 0.0
    %204 = vmatprep.subr.mxu0 0.0
    %205 = vmatpush1.msra.mxu0 0.0
    %206 = vmatprep.subr.mxu0 0.0
    %207 = vmatpush1.msra.mxu0 0.0
    %208 = vmatprep.mubr.f32.mxu0 0.0
    %209 = vmatmul.mubr.f32.gmra.mrb[0].mxu0 %v139
    %v210 = vpop.f32.mrb[0].mxu0
    %v211 = vadd.f32 0.0, %v210
    %v212 = vpop.f32.mrb[0].mxu0
    %213 = vmatprep.mubr.f32.mxu0 0.0
    %214 = vmatmul.mubr.f32.gmra.mrb[0].mxu0 %v142
    %v215 = vpop.f32.mrb[0].mxu0
    %v216 = vadd.f32 0.0, %v215
    %v217 = vpop.f32.mrb[0].mxu0
    %218 = vdwg.mxu0
    %vm219 = vcmask 261120
    %v220 = vsel %vm219, %v211, 0.0
    %v221 = vsel %vm219, %v216, 0.0
    %v222 = vadd.f32 %v220, %v221
    %v223 = vrot.slane %v222, 4
    %v224 = vadd.f32 %v222, %v223
    %v225 = vrot.slane %v224, 2
    %v226 = vadd.f32 %v224, %v225
    %v227 = vrot.slane %v226, 1
    %v228 = vadd.f32 %v226, %v227
    %v229 = vmul.f32 %v228, %v104
    %v230 = vmul.f32 %v211, %v211
    %v231 = vmul.f32 %v216, %v216
    %v232 = vsel %vm219, %v230, 0.0
    %v233 = vsel %vm219, %v231, 0.0
    %v234 = vadd.f32 %v232, %v233
    %v235 = vrot.slane %v234, 4
    %v236 = vadd.f32 %v234, %v235
    %v237 = vrot.slane %v236, 2
    %v238 = vadd.f32 %v236, %v237
    %v239 = vrot.slane %v238, 1
    %v240 = vadd.f32 %v238, %v239
    %v241 = vmul.f32 %v240, %v104
    %v242 = vmul.f32 %v229, %v229
    %v243 = vsub.f32 %v241, %v242
    %v244 = vadd.f32 %v243, 1e-05
    %v245 = vrsqrt.pop %v244
    %v246 = vmul.f32 %v87, %v245
    %v247 = vmul.f32 %v229, %v246
    %v248 = vsub.f32 %v88, %v247
    %v249 = vlaneseq
    %v250 = vshrl.u32 %v249, 7
    %v251 = vsub.s32 0, %v250
    %v252 = vrot.slane %v246, %v251
    %v253 = vmul.f32 %v211, %v252
    %v254 = vmul.f32 %v216, %v252
    %v255 = vlaneseq
    %v256 = vshrl.u32 %v255, 7
    %v257 = vsub.s32 0, %v256
    %v258 = vrot.slane %v248, %v257
    %v259 = vadd.f32 %v253, %v258
    %v260 = vadd.f32 %v254, %v258
    %v261 = vmax.f32 %v259, 0.0
    %v262 = vmax.f32 %v260, 0.0
    %v263 = vld [vmem:[#allocation8] sm:$0xff]
    %v264 = vld [vmem:[#allocation8 + $0x8] sm:$0xff]
    %v265 = vld [vmem:[#allocation8 + $0x10] sm:$0xff]
    %v266 = vld [vmem:[#allocation8 + $0x18] sm:$0xff]
    %v268 = vsel %vm219, %v261, 0
    %v271 = vsel %vm219, %v262, 0
    %273 = vmatprep.subr.mxu0 0.0
    %274 = vmatpush1.msra.mxu0 %v263
    %275 = vmatprep.subr.mxu0 0.0
    %276 = vmatpush1.msra.mxu0 %v264
    %277 = vmatprep.subr.mxu0 0.0
    %278 = vmatpush1.msra.mxu0 %v265
    %279 = vmatprep.subr.mxu0 0.0
    %280 = vmatpush1.msra.mxu0 %v266
    %281 = vmatprep.subr.mxu0 0.0
    %282 = vmatpush1.msra.mxu0 0.0
    %283 = vmatprep.subr.mxu0 0.0
    %284 = vmatpush1.msra.mxu0 0.0
    %285 = vmatprep.subr.mxu0 0.0
    %286 = vmatpush1.msra.mxu0 0.0
    %287 = vmatprep.subr.mxu0 0.0
    %288 = vmatpush1.msra.mxu0 0.0
    %289 = vmatprep.subr.mxu0 0.0
    %290 = vmatpush1.msra.mxu0 0.0
    %291 = vmatprep.subr.mxu0 0.0
    %292 = vmatpush1.msra.mxu0 0.0
    %293 = vmatprep.subr.mxu0 0.0
    %294 = vmatpush1.msra.mxu0 0.0
    %295 = vmatprep.subr.mxu0 0.0
    %296 = vmatpush1.msra.mxu0 0.0
    %297 = vmatprep.subr.mxu0 0.0
    %298 = vmatpush1.msra.mxu0 0.0
    %299 = vmatprep.subr.mxu0 0.0
    %300 = vmatpush1.msra.mxu0 0.0
    %301 = vmatprep.subr.mxu0 0.0
    %302 = vmatpush1.msra.mxu0 0.0
    %303 = vmatprep.subr.mxu0 0.0
    %304 = vmatpush1.msra.mxu0 0.0
    %305 = vmatprep.subr.mxu0 0.0
    %306 = vmatpush1.msra.mxu0 0.0
    %307 = vmatprep.subr.mxu0 0.0
    %308 = vmatpush1.msra.mxu0 0.0
    %309 = vmatprep.subr.mxu0 0.0
    %310 = vmatpush1.msra.mxu0 0.0
    %311 = vmatprep.subr.mxu0 0.0
    %312 = vmatpush1.msra.mxu0 0.0
    %313 = vmatprep.subr.mxu0 0.0
    %314 = vmatpush1.msra.mxu0 0.0
    %315 = vmatprep.subr.mxu0 0.0
    %316 = vmatpush1.msra.mxu0 0.0
    %317 = vmatprep.subr.mxu0 0.0
    %318 = vmatpush1.msra.mxu0 0.0
    %319 = vmatprep.subr.mxu0 0.0
    %320 = vmatpush1.msra.mxu0 0.0
    %321 = vmatprep.subr.mxu0 0.0
    %322 = vmatpush1.msra.mxu0 0.0
    %323 = vmatprep.subr.mxu0 0.0
    %324 = vmatpush1.msra.mxu0 0.0
    %325 = vmatprep.subr.mxu0 0.0
    %326 = vmatpush1.msra.mxu0 0.0
    %327 = vmatprep.subr.mxu0 0.0
    %328 = vmatpush1.msra.mxu0 0.0
    %329 = vmatprep.subr.mxu0 0.0
    %330 = vmatpush1.msra.mxu0 0.0
    %331 = vmatprep.subr.mxu0 0.0
    %332 = vmatpush1.msra.mxu0 0.0
    %333 = vmatprep.subr.mxu0 0.0
    %334 = vmatpush1.msra.mxu0 0.0
    %335 = vmatprep.subr.mxu0 0.0
    %336 = vmatpush1.msra.mxu0 0.0
    %337 = vmatprep.mubr.f32.mxu0 0.0
    %338 = vmatmul.mubr.f32.gmra.mrb[0].mxu0 %v268
    %v339 = vpop.f32.mrb[0].mxu0
    %v340 = vadd.f32 0.0, %v339
    %v341 = vpop.f32.mrb[0].mxu0
    %342 = vmatprep.mubr.f32.mxu0 0.0
    %343 = vmatmul.mubr.f32.gmra.mrb[0].mxu0 %v271
    %v344 = vpop.f32.mrb[0].mxu0
    %v345 = vadd.f32 0.0, %v344
    %v346 = vpop.f32.mrb[0].mxu0
    %347 = vdwg.mxu0
    %v348 = vsel %vm219, %v340, 0.0
    %v349 = vsel %vm219, %v345, 0.0
    %v350 = vadd.f32 %v348, %v349
    %v351 = vrot.slane %v350, 4
    %v352 = vadd.f32 %v350, %v351
    %v353 = vrot.slane %v352, 2
    %v354 = vadd.f32 %v352, %v353
    %v355 = vrot.slane %v354, 1
    %v356 = vadd.f32 %v354, %v355
    %v357 = vmul.f32 %v356, %v104
    %v358 = vmul.f32 %v340, %v340
    %v359 = vmul.f32 %v345, %v345
    %v360 = vsel %vm219, %v358, 0.0
    %v361 = vsel %vm219, %v359, 0.0
    %v362 = vadd.f32 %v360, %v361
    %v363 = vrot.slane %v362, 4
    %v364 = vadd.f32 %v362, %v363
    %v365 = vrot.slane %v364, 2
    %v366 = vadd.f32 %v364, %v365
    %v367 = vrot.slane %v366, 1
    %v368 = vadd.f32 %v366, %v367
    %v369 = vmul.f32 %v368, %v104
    %v370 = vmul.f32 %v357, %v357
    %v371 = vsub.f32 %v369, %v370
    %v372 = vadd.f32 %v371, 1e-05
    %v373 = vrsqrt.pop %v372
    %v374 = vmul.f32 %v89, %v373
    %v375 = vmul.f32 %v357, %v374
    %v376 = vsub.f32 %v90, %v375
    %v377 = vlaneseq
    %v378 = vshrl.u32 %v377, 7
    %v379 = vsub.s32 0, %v378
    %v380 = vrot.slane %v374, %v379
    %v381 = vmul.f32 %v340, %v380
    %v382 = vmul.f32 %v345, %v380
    %v383 = vlaneseq
    %v384 = vshrl.u32 %v383, 7
    %v385 = vsub.s32 0, %v384
    %v386 = vrot.slane %v376, %v385
    %v387 = vadd.f32 %v381, %v386
    %v388 = vadd.f32 %v382, %v386
    %v389 = vmax.f32 %v387, 0.0
    %v390 = vmax.f32 %v388, 0.0
    %v391 = vld [vmem:[#allocation10] sm:$0xff]
    %v392 = vld [vmem:[#allocation10 + $0x8] sm:$0xff]
    %v393 = vld [vmem:[#allocation10 + $0x10] sm:$0xff]
    %v394 = vld [vmem:[#allocation10 + $0x18] sm:$0xff]
    %v395 = vlaneseq
    %v396 = vshrl.u32 %v395, 7
    %v397 = vsub.s32 0, %v396
    %v398 = vrot.slane %v91, %v397
    %v400 = vsel %vm219, %v389, 0
    %v403 = vsel %vm219, %v390, 0
    %405 = vmatprep.subr.mxu0 0.0
    %406 = vmatpush1.msra.mxu0 %v391
    %407 = vmatprep.subr.mxu0 0.0
    %408 = vmatpush1.msra.mxu0 %v392
    %409 = vmatprep.subr.mxu0 0.0
    %410 = vmatpush1.msra.mxu0 %v393
    %411 = vmatprep.subr.mxu0 0.0
    %412 = vmatpush1.msra.mxu0 %v394
    %413 = vmatprep.subr.mxu0 0.0
    %414 = vmatpush1.msra.mxu0 0.0
    %415 = vmatprep.subr.mxu0 0.0
    %416 = vmatpush1.msra.mxu0 0.0
    %417 = vmatprep.subr.mxu0 0.0
    %418 = vmatpush1.msra.mxu0 0.0
    %419 = vmatprep.subr.mxu0 0.0
    %420 = vmatpush1.msra.mxu0 0.0
    %421 = vmatprep.subr.mxu0 0.0
    %422 = vmatpush1.msra.mxu0 0.0
    %423 = vmatprep.subr.mxu0 0.0
    %424 = vmatpush1.msra.mxu0 0.0
    %425 = vmatprep.subr.mxu0 0.0
    %426 = vmatpush1.msra.mxu0 0.0
    %427 = vmatprep.subr.mxu0 0.0
    %428 = vmatpush1.msra.mxu0 0.0
    %429 = vmatprep.subr.mxu0 0.0
    %430 = vmatpush1.msra.mxu0 0.0
    %431 = vmatprep.subr.mxu0 0.0
    %432 = vmatpush1.msra.mxu0 0.0
    %433 = vmatprep.subr.mxu0 0.0
    %434 = vmatpush1.msra.mxu0 0.0
    %435 = vmatprep.subr.mxu0 0.0
    %436 = vmatpush1.msra.mxu0 0.0
    %437 = vmatprep.subr.mxu0 0.0
    %438 = vmatpush1.msra.mxu0 0.0
    %439 = vmatprep.subr.mxu0 0.0
    %440 = vmatpush1.msra.mxu0 0.0
    %441 = vmatprep.subr.mxu0 0.0
    %442 = vmatpush1.msra.mxu0 0.0
    %443 = vmatprep.subr.mxu0 0.0
    %444 = vmatpush1.msra.mxu0 0.0
    %445 = vmatprep.subr.mxu0 0.0
    %446 = vmatpush1.msra.mxu0 0.0
    %447 = vmatprep.subr.mxu0 0.0
    %448 = vmatpush1.msra.mxu0 0.0
    %449 = vmatprep.subr.mxu0 0.0
    %450 = vmatpush1.msra.mxu0 0.0
    %451 = vmatprep.subr.mxu0 0.0
    %452 = vmatpush1.msra.mxu0 0.0
    %453 = vmatprep.subr.mxu0 0.0
    %454 = vmatpush1.msra.mxu0 0.0
    %455 = vmatprep.subr.mxu0 0.0
    %456 = vmatpush1.msra.mxu0 0.0
    %457 = vmatprep.subr.mxu0 0.0
    %458 = vmatpush1.msra.mxu0 0.0
    %459 = vmatprep.subr.mxu0 0.0
    %460 = vmatpush1.msra.mxu0 0.0
    %461 = vmatprep.subr.mxu0 0.0
    %462 = vmatpush1.msra.mxu0 0.0
    %463 = vmatprep.subr.mxu0 0.0
    %464 = vmatpush1.msra.mxu0 0.0
    %465 = vmatprep.subr.mxu0 0.0
    %466 = vmatpush1.msra.mxu0 0.0
    %467 = vmatprep.subr.mxu0 0.0
    %468 = vmatpush1.msra.mxu0 0.0
    %469 = vmatprep.mubr.f32.mxu0 0.0
    %470 = vmatmul.mubr.f32.gmra.mrb[0].mxu0 %v400
    %v471 = vpop.f32.mrb[0].mxu0
    %v472 = vadd.f32 %v398, %v471
    %v473 = vpop.f32.mrb[0].mxu0
    %474 = vmatprep.mubr.f32.mxu0 0.0
    %475 = vmatmul.mubr.f32.gmra.mrb[0].mxu0 %v403
    %v476 = vpop.f32.mrb[0].mxu0
    %v477 = vadd.f32 %v398, %v476
    %v478 = vpop.f32.mrb[0].mxu0
    %479 = vdwg.mxu0
    %vm480 = vcmask 31744
    %481 = vst.msk [vmem:[#allocation11] sm:$0xff] %vm480, %v472
    %482 = vst.msk [vmem:[#allocation11 + $0x8] sm:$0xff] %vm480, %v477
    // Predicated region
    $region42: #{tpu_custom_call.1} parent=1 // pred_check
      _
    $region43: #{tpu_custom_call.1} parent=1 // pred_check_branch
      %484 = sbr.rel (0) target = $region45
    $region44: #{tpu_custom_call.1} parent=1 // pred_region
      %s486 = ssub.s32 256, 256
      %487 = vsyncadd [#allocation4], %s486
      %s488 = sshll.u32 [#allocation11], 4
      %s489 = int_to_ptr.vmem [resolvable:$true] %s488
      %494 = dma.vmem_to_hbm [thread:$0]  %s489, 256, %s5, [#allocation4], 128, 128, 8
    $region45: #{tpu_custom_call.1} parent=1 // pred_fallthru
      _
    // Predicated region
    $region46: #{tpu_custom_call.1} parent=1 // pred_check
      _
    $region47: #{tpu_custom_call.1} parent=1 // pred_check_branch
      %496 = sbr.rel (0) target = $region49
    $region48: #{tpu_custom_call.1} parent=1 // pred_region
      %497 = dma.done [#allocation4], 256
    $region49: #{tpu_custom_call.1} parent=1 // pred_fallthru
      _
    %498 = vsyncpa [#allocation3], 1
    %499 = vsyncpa [#allocation6], 1
    %500 = vsyncpa [#allocation9], 1
    %501 = vsyncpa [#allocation4], 1

</llo_original>
